<compile_context>
chip_gen: v6e
topology: v6e:2x2x1
jax: 0.10.0
libtpu: 0.0.40
codegen_flags: <defaults>
</compile_context>

<pallas_src>
import functools

import jax
import jax.numpy as jnp
from jax.experimental import pallas as pl
from jax.experimental.pallas import tpu as pltpu

FOCUSING_PARAM = 2.0
BALANCE_PARAM = 0.25


def _ce_partial_kernel(logits_ref, tgt_ref, out_ref, *, n_total, tile_n):
    """Accumulates this core's partial sum of per-sample cross entropy.

    grid = (num_cores, tiles_per_core):
      axis 0 ("parallel")  -> split across TensorCores (megacore on v7x)
      axis 1 ("arbitrary") -> reduction over batch tiles owned by this core
    """
    core = pl.program_id(0)
    step = pl.program_id(1)
    tiles_per_core = pl.num_programs(1)
    global_tile = core * tiles_per_core + step

    @pl.when(step == 0)
    def _init():
        out_ref[...] = jnp.zeros_like(out_ref)

    x = logits_ref[...].astype(jnp.float32)            # (tile_n, C)
    t = tgt_ref[...]                                    # (tile_n, 1) int32

    # Numerically stable logsumexp over classes.
    m = jnp.max(x, axis=-1, keepdims=True)                                   # (tile_n, 1)
    lse = m + jnp.log(jnp.sum(jnp.exp(x - m), axis=-1, keepdims=True))       # (tile_n, 1)

    # Target-class logit via lane-iota select (no one-hot matmul / cast).
    col = jax.lax.broadcasted_iota(jnp.int32, x.shape, 1)                    # (tile_n, C)
    x_t = jnp.sum(jnp.where(col == t, x, 0.0), axis=-1, keepdims=True)       # (tile_n, 1)

    ce = lse - x_t                                                           # (tile_n, 1)

    # Mask rows past the true batch size. `rem <= 0` for clamped out-of-range
    # duplicate tiles, so they contribute exactly zero; the select also discards
    # any inf/NaN produced from ragged-tile garbage logits.
    rem = n_total - global_tile * tile_n
    row = jax.lax.broadcasted_iota(jnp.int32, ce.shape, 0)
    ce = jnp.where(row < rem, ce, 0.0)

    out_ref[...] += jnp.sum(ce)                                              # (1, 1, 1)


def focal_loss(output: jax.Array, target: jax.Array, *,
               focusing_param: float = FOCUSING_PARAM,
               balance_param: float = BALANCE_PARAM,
               tile_n: int | None = None) -> jax.Array:
    """output: (N, C) logits (f32 or bf16); target: (N,) int class indices. Returns scalar loss."""
    n, c = output.shape
    itemsize = jnp.dtype(output.dtype).itemsize
    packing = max(1, 4 // itemsize)          # 1 for f32, 2 for bf16, 4 for int8/fp8
    sub_mult = 8 * packing                   # packed sublane granularity of the input dtype
    c_pad = ((c + 127) // 128) * 128         # lane-padded class dim

    if tile_n is None:
        # VMEM bytes accounted per batch row:
        #   2 * c_pad * itemsize : double-buffered logits input block (lane padded, native dtype)
        #   2 * 128 * 4          : double-buffered (tile_n,1) int32 target block (lane pads to 128)
        #   3 * c_pad * 4        : live f32 temporaries inside the kernel (cast / exp / select)
        per_row = 2 * c_pad * itemsize + 2 * 128 * 4 + 3 * c_pad * 4
        budget = 28 * 1024 * 1024
        tile_n = budget // per_row
    tile_n = max(sub_mult, (tile_n // sub_mult) * sub_mult)
    tile_n = min(tile_n, ((n + sub_mult - 1) // sub_mult) * sub_mult)

    num_tiles = pl.cdiv(n, tile_n)
    num_cores = 2 if num_tiles > 1 else 1
    tiles_per_core = pl.cdiv(num_tiles, num_cores)
    last_block = num_tiles - 1

    # Clamp the block index so padded grid steps (when num_cores doesn't divide
    # num_tiles) re-read the last valid tile instead of DMAing out of bounds;
    # the in-kernel row mask zeroes their contribution.
    def in_map(core, step):
        return (jnp.minimum(core * tiles_per_core + step, last_block), 0)

    def out_map(core, step):
        return (core, 0, 0)

    tgt2d = target.astype(jnp.int32).reshape(n, 1)
    kernel = functools.partial(_ce_partial_kernel, n_total=n, tile_n=tile_n)

    partial_sums = pl.pallas_call(
        kernel,
        out_shape=jax.ShapeDtypeStruct((num_cores, 1, 1), jnp.float32),
        grid=(num_cores, tiles_per_core),
        in_specs=[
            pl.BlockSpec((tile_n, c), in_map),     # logits tile (native dtype)
            pl.BlockSpec((tile_n, 1), in_map),     # target tile
        ],
        out_specs=pl.BlockSpec((1, 1, 1), out_map),  # per-core partial CE sum (resident)
        compiler_params=pltpu.CompilerParams(
            dimension_semantics=("parallel", "arbitrary"),
            vmem_limit_bytes=48 * 1024 * 1024,
        ),
    )(output, tgt2d)

    # Scalar finalize in the wrapper: combine per-core partials and apply the focal
    # transform with the general focusing_param (a handful of scalar ops).
    ce_mean = jnp.sum(partial_sums) / jnp.float32(n)
    logpt = -ce_mean
    pt = jnp.exp(logpt)
    return balance_param * (-((1.0 - pt) ** focusing_param) * logpt)


def _reference(output, target):
    # Pure-JAX reference of the PyTorch forward for a sanity check.
    lse = jax.nn.logsumexp(output.astype(jnp.float32), axis=-1)
    x_t = jnp.take_along_axis(output.astype(jnp.float32), target[:, None], axis=-1)[:, 0]
    ce = jnp.mean(lse - x_t)
    logpt = -ce
    pt = jnp.exp(logpt)
    return BALANCE_PARAM * (-((1.0 - pt) ** FOCUSING_PARAM) * logpt)


if __name__ == "__main__":
    key = jax.random.PRNGKey(0)
    k_logits, k_tgt = jax.random.split(key)

    # Small, deterministic shapes. N deliberately not a multiple of the tile to
    # exercise the ragged-last-tile row mask and the clamped duplicate tiles.
    N, C = 50, 32
    logits = jax.random.normal(k_logits, (N, C), dtype=jnp.float32)
    target = jax.random.randint(k_tgt, (N,), 0, C, dtype=jnp.int32)

    ref = _reference(logits, target)

    # Explicit small tile: grid (2, 2) -> exercises the 2-core split + ragged masking.
    loss_tiled = focal_loss(logits, target, tile_n=16)
    jax.block_until_ready(loss_tiled)
    assert jnp.allclose(loss_tiled, ref, atol=1e-5, rtol=1e-5), (loss_tiled, ref)

    # Default heuristic path (single tile at this tiny N).
    loss_default = focal_loss(logits, target)
    jax.block_until_ready(loss_default)
    assert jnp.allclose(loss_default, ref, atol=1e-5, rtol=1e-5), (loss_default, ref)

    print("KERNEL_OK")
</pallas_src>

<mosaic_0001>
module attributes {stable_mosaic.version = 11 : i64} {
  func.func @_ce_partial_kernel(%arg0: i32, %arg1: i32, %arg2: memref<16x32xf32, #tpu.memory_space<vmem>>, %arg3: memref<16x1xi32, #tpu.memory_space<vmem>>, %arg4: memref<1x1x1xf32, #tpu.memory_space<vmem>>) attributes {dimension_semantics = [#tpu.dimension_semantics<parallel>, #tpu.dimension_semantics<arbitrary>], iteration_bounds = array<i64: 2, 2>, scalar_prefetch = 0 : i64, scratch_operands = 0 : i64, tpu.core_type = #tpu.core_type<tc>, window_params = [{transform_indices = @transform_0, window_bounds = array<i64: 16, 32>}, {transform_indices = @transform_1, window_bounds = array<i64: 16, 1>}, {transform_indices = @transform_2, window_bounds = array<i64: 1, 1, 1>}]} {
    %c2_i32 = arith.constant 2 : i32
    %0 = arith.muli %arg0, %c2_i32 : i32
    %1 = arith.addi %0, %arg1 : i32
    %c0_i32 = arith.constant 0 : i32
    %2 = arith.cmpi eq, %arg1, %c0_i32 : i32
    %3 = arith.extui %2 : i1 to i32
    %c0_i32_0 = arith.constant 0 : i32
    %4 = arith.cmpi ne, %3, %c0_i32_0 : i32
    scf.if %4 {
      %cst_15 = arith.constant 0.000000e+00 : f32
      %39 = vector.broadcast %cst_15 : f32 to vector<1x1x1xf32>
      %c0_16 = arith.constant 0 : index
      %c0_17 = arith.constant 0 : index
      %c0_18 = arith.constant 0 : index
      %40 = vector.load %arg4[%c0_16, %c0_17, %c0_18] : memref<1x1x1xf32, #tpu.memory_space<vmem>>, vector<1x1x1xf32>
      tpu.vector_store %arg4[%c0_16, %c0_17, %c0_18], %39 {strides = array<i32>} : memref<1x1x1xf32, #tpu.memory_space<vmem>>, vector<1x1x1xf32>,
    } else {
    }
    %c0 = arith.constant 0 : index
    %c0_1 = arith.constant 0 : index
    %5 = vector.load %arg2[%c0, %c0_1] : memref<16x32xf32, #tpu.memory_space<vmem>>, vector<16x32xf32>
    %c0_2 = arith.constant 0 : index
    %c0_3 = arith.constant 0 : index
    %6 = vector.load %arg3[%c0_2, %c0_3] : memref<16x1xi32, #tpu.memory_space<vmem>>, vector<16x1xi32>
    %cst = arith.constant dense<0xFF800000> : vector<16xf32>
    %7 = vector.multi_reduction <maximumf>, %5, %cst [1] : vector<16x32xf32> to vector<16xf32>
    %8 = vector.shape_cast %7 : vector<16xf32> to vector<16x1xf32>
    %9 = vector.broadcast %8 : vector<16x1xf32> to vector<16x32xf32>
    %10 = arith.subf %5, %9 : vector<16x32xf32>
    %11 = math.exp %10 : vector<16x32xf32>
    %cst_4 = arith.constant dense<0.000000e+00> : vector<16xf32>
    %12 = vector.multi_reduction <add>, %11, %cst_4 [1] : vector<16x32xf32> to vector<16xf32>
    %13 = vector.shape_cast %12 : vector<16xf32> to vector<16x1xf32>
    %14 = math.log %13 : vector<16x1xf32>
    %15 = arith.addf %8, %14 : vector<16x1xf32>
    %16 = tpu.iota {dimensions = array<i32: 1>} : vector<16x32xi32>
    %17 = vector.broadcast %6 : vector<16x1xi32> to vector<16x32xi32>
    %18 = arith.cmpi eq, %16, %17 : vector<16x32xi32>
    %cst_5 = arith.constant 0.000000e+00 : f32
    %19 = vector.broadcast %cst_5 : f32 to vector<16x32xf32>
    %20 = arith.select %18, %5, %19 : vector<16x32xi1>, vector<16x32xf32>
    %cst_6 = arith.constant dense<0.000000e+00> : vector<16xf32>
    %21 = vector.multi_reduction <add>, %20, %cst_6 [1] : vector<16x32xf32> to vector<16xf32>
    %22 = vector.shape_cast %21 : vector<16xf32> to vector<16x1xf32>
    %23 = arith.subf %15, %22 : vector<16x1xf32>
    %c16_i32 = arith.constant 16 : i32
    %24 = arith.muli %1, %c16_i32 : i32
    %c50_i32 = arith.constant 50 : i32
    %25 = arith.subi %c50_i32, %24 : i32
    %26 = tpu.iota {dimensions = array<i32: 0>} : vector<16x1xi32>
    %27 = vector.broadcast %25 : i32 to vector<16x1xi32>
    %28 = arith.cmpi slt, %26, %27 : vector<16x1xi32>
    %cst_7 = arith.constant 0.000000e+00 : f32
    %29 = vector.broadcast %cst_7 : f32 to vector<16x1xf32>
    %30 = arith.select %28, %23, %29 : vector<16x1xi1>, vector<16x1xf32>
    %c0_8 = arith.constant 0 : index
    %c0_9 = arith.constant 0 : index
    %c0_10 = arith.constant 0 : index
    %31 = vector.load %arg4[%c0_8, %c0_9, %c0_10] : memref<1x1x1xf32, #tpu.memory_space<vmem>>, vector<1x1x1xf32>
    %32 = vector.shape_cast %30 : vector<16x1xf32> to vector<1x16x1xf32>
    %cst_11 = arith.constant dense<0.000000e+00> : vector<1xf32>
    %33 = vector.multi_reduction <add>, %32, %cst_11 [1, 2] : vector<1x16x1xf32> to vector<1xf32>
    %34 = vector.shape_cast %33 : vector<1xf32> to vector<1x1x1xf32>
    %35 = vector.extract %34[0, 0, 0] : f32 from vector<1x1x1xf32>
    %36 = vector.broadcast %35 : f32 to vector<1x1x1xf32>
    %37 = arith.addf %31, %36 : vector<1x1x1xf32>
    %c0_12 = arith.constant 0 : index
    %c0_13 = arith.constant 0 : index
    %c0_14 = arith.constant 0 : index
    %38 = vector.load %arg4[%c0_12, %c0_13, %c0_14] : memref<1x1x1xf32, #tpu.memory_space<vmem>>, vector<1x1x1xf32>
    tpu.vector_store %arg4[%c0_12, %c0_13, %c0_14], %37 {strides = array<i32>} : memref<1x1x1xf32, #tpu.memory_space<vmem>>, vector<1x1x1xf32>,
    return
  }
  func.func @transform_0(%arg0: i32, %arg1: i32) -> (i32, i32) {
    %c2_i32 = arith.constant 2 : i32
    %0 = arith.muli %arg0, %c2_i32 : i32
    %1 = arith.addi %0, %arg1 : i32
    %c3_i32 = arith.constant 3 : i32
    %2 = arith.minsi %1, %c3_i32 : i32
    %c0_i32 = arith.constant 0 : i32
    %c0_i32_0 = arith.constant 0 : i32
    return %2, %c0_i32 : i32, i32
  }
  func.func @transform_1(%arg0: i32, %arg1: i32) -> (i32, i32) {
    %c2_i32 = arith.constant 2 : i32
    %0 = arith.muli %arg0, %c2_i32 : i32
    %1 = arith.addi %0, %arg1 : i32
    %c3_i32 = arith.constant 3 : i32
    %2 = arith.minsi %1, %c3_i32 : i32
    %c0_i32 = arith.constant 0 : i32
    %c0_i32_0 = arith.constant 0 : i32
    return %2, %c0_i32 : i32, i32
  }
  func.func @transform_2(%arg0: i32, %arg1: i32) -> (i32, i32, i32) {
    %c0_i32 = arith.constant 0 : i32
    %c0_i32_0 = arith.constant 0 : i32
    %c0_i32_1 = arith.constant 0 : i32
    return %arg0, %c0_i32, %c0_i32_0 : i32, i32, i32
  }
}

</mosaic_0001>

<llo_original>
// kernel: tpu_custom_call.1
$region0: #{tpu_custom_call.1}
  #allocation0 [shape = 'u32[]', space=smem, size = 0x4, offset = 0x4, fixed_abs, tag = 'smem constant byte address 0x4 - core index']
  #allocation1 [shape = 'u32[144,128]{1,0:T(1,128)}', space=vmem, size = 0x12000, scoped, tag = 'internal scratch']
  %s0 = inlined_call_operand.vmem [shape: f32[50,32], index: 0, kind: input, shape index: {}]
  %s1 = inlined_call_operand.vmem [shape: s32[50,1], index: 1, kind: input, shape index: {}]
  %s2 = inlined_call_operand.vmem [shape: f32[2,1,1], index: 2, kind: output, shape index: {}]
  %s3 = sld [smem:[#allocation0]]
  $region45: #{tpu_custom_call.1} parent=0
    _
  %s5 = ssub.s32 1, %s3
  %s6 = scalar_select 0, %s5, %s3
  loop: start=0, step=1, limit=6
  $region2: #{tpu_custom_call.1} parent=0 // loop_pre_header
    _
  $region3: #{tpu_custom_call.1} parent=0 // loop_header
    %s8 = sphi 0, %s12
    %p9 = scmp.ge.s32.totalorder %s8, 6
    %s15 = sphi 0, %s27
    %s16 = sphi 0, %s23
    %s17 = sphi 0, %s15
    %s18 = sphi 0, %s16
    %s19 = sphi 0, %s17
    %s20 = sphi 0, %s18
    %s38 = sphi 0, %s40
    %s41 = sphi 0, %s38
    %s42 = sphi 0, %s41
    %s58 = sphi 0, %s42
    %s72 = sphi 0, %s74
    %s75 = sphi 0, %s72
    %s76 = sphi 0, %s75
    %s92 = sphi 0, %s76
    %s98 = sphi 0, %s100
    %s101 = sphi 0, %s98
    %s102 = sphi 0, %s101
    %s118 = sphi 0, %s102
  $region4: #{tpu_custom_call.1} parent=0 // loop_header_branch
    %11 = sbr.rel (%p9) target = $region8
  $region5: #{tpu_custom_call.1} parent=0 // loop_body
    %s13 = ssub.s32 %s8, 1
    %s14 = ssub.s32 %s8, 2
    %s21 = sadd.s32 1, %s16
    %p22 = scmp.ge.s32.totalorder %s21, 2
    %s23 = scalar_select %p22, 0, %s21
    %s24 = sadd.s32 1, %s15
    %s25 = scalar_select %p22, %s24, %s15
    %p26 = scmp.ge.s32.totalorder %s25, 2
    %s27 = scalar_select %p26, 0, %s25
    %s28 = smul.u32 %s15, 2
    %s29 = sadd.s32 %s28, %s16
    %p30 = scmp.lt.s32.totalorder %s29, 3
    %s31 = scalar_select %p30, %s29, 3
    %s32 = smul.u32 %s27, 2
    %s33 = sadd.s32 %s32, %s23
    %p34 = scmp.lt.s32.totalorder %s33, 3
    %s35 = scalar_select %p34, %s33, 3
    %s36 = ssub.s32 %s31, %s35
    %p37 = scmp.eq.s32.totalorder %s36, 0
    %s39 = sadd.s32 %s38, 1
    %s40 = scalar_select %p37, %s38, %s39
    %p43 = pneg %p37
    %p44 = scmp.eq.s32.totalorder %s8, 3
    %p45 = por %p43, %p44
    %p46 = scmp.ne.s32.totalorder %s38, %s41
    %p47 = scmp.eq.s32.totalorder %s8, 0
    %p48 = por %p46, %p47
    %p49 = scmp.ne.s32.totalorder %s38, %s41
    %p50 = scmp.eq.s32.totalorder %s13, 3
    %p51 = por %p49, %p50
    %p52 = scmp.ne.s32.totalorder %s41, %s42
    %p53 = scmp.eq.s32.totalorder %s13, 0
    %p54 = por %p52, %p53
    %p55 = scmp.ne.s32.totalorder %s41, %s42
    %p56 = scmp.eq.s32.totalorder %s14, 3
    %p57 = por %p55, %p56
    %p59 = scmp.ne.s32.totalorder %s42, %s58
    %p60 = scmp.eq.s32.totalorder %s14, 0
    %p61 = por %p59, %p60
    %s62 = smul.u32 %s15, 2
    %s63 = sadd.s32 %s62, %s16
    %p64 = scmp.lt.s32.totalorder %s63, 3
    %s65 = scalar_select %p64, %s63, 3
    %s66 = smul.u32 %s27, 2
    %s67 = sadd.s32 %s66, %s23
    %p68 = scmp.lt.s32.totalorder %s67, 3
    %s69 = scalar_select %p68, %s67, 3
    %s70 = ssub.s32 %s65, %s69
    %p71 = scmp.eq.s32.totalorder %s70, 0
    %s73 = sadd.s32 %s72, 1
    %s74 = scalar_select %p71, %s72, %s73
    %p77 = pneg %p71
    %p78 = scmp.eq.s32.totalorder %s8, 3
    %p79 = por %p77, %p78
    %p80 = scmp.ne.s32.totalorder %s72, %s75
    %p81 = scmp.eq.s32.totalorder %s8, 0
    %p82 = por %p80, %p81
    %p83 = scmp.ne.s32.totalorder %s72, %s75
    %p84 = scmp.eq.s32.totalorder %s13, 3
    %p85 = por %p83, %p84
    %p86 = scmp.ne.s32.totalorder %s75, %s76
    %p87 = scmp.eq.s32.totalorder %s13, 0
    %p88 = por %p86, %p87
    %p89 = scmp.ne.s32.totalorder %s75, %s76
    %p90 = scmp.eq.s32.totalorder %s14, 3
    %p91 = por %p89, %p90
    %p93 = scmp.ne.s32.totalorder %s76, %s92
    %p94 = scmp.eq.s32.totalorder %s14, 0
    %p95 = por %p93, %p94
    %s96 = ssub.s32 %s15, %s27
    %p97 = scmp.eq.s32.totalorder %s96, 0
    %s99 = sadd.s32 %s98, 1
    %s100 = scalar_select %p97, %s98, %s99
    %p103 = pneg %p97
    %p104 = scmp.eq.s32.totalorder %s8, 3
    %p105 = por %p103, %p104
    %p106 = scmp.ne.s32.totalorder %s98, %s101
    %p107 = scmp.eq.s32.totalorder %s8, 0
    %p108 = por %p106, %p107
    %p109 = scmp.ne.s32.totalorder %s98, %s101
    %p110 = scmp.eq.s32.totalorder %s13, 3
    %p111 = por %p109, %p110
    %p112 = scmp.ne.s32.totalorder %s101, %s102
    %p113 = scmp.eq.s32.totalorder %s13, 0
    %p114 = por %p112, %p113
    %p115 = scmp.ne.s32.totalorder %s101, %s102
    %p116 = scmp.eq.s32.totalorder %s14, 3
    %p117 = por %p115, %p116
    %p119 = scmp.ne.s32.totalorder %s102, %s118
    %p120 = scmp.eq.s32.totalorder %s14, 0
    %p121 = por %p119, %p120
    %p122 = scmp.le.s32.totalorder 1, %s8
    %p123 = scmp.lt.s32.totalorder %s8, 5
    %p124 = pnand %p122, %p123
    %p125 = pneg %p124
    // Predicated region
    $region9: #{tpu_custom_call.1} parent=5 // pred_check
      _
    $region10: #{tpu_custom_call.1} parent=5 // pred_check_branch
      %127 = sbr.rel (%p124) target = $region12
    $region11: #{tpu_custom_call.1} parent=5 // pred_region
      %s128 = ssub.s32 %s8, 1
    $region12: #{tpu_custom_call.1} parent=5 // pred_fallthru
      _
    %p129 = scmp.lt.s32.totalorder %s8, 4
    // Predicated region
    $region13: #{tpu_custom_call.1} parent=5 // pred_check
      %p130 = pneg %p129
    $region14: #{tpu_custom_call.1} parent=5 // pred_check_branch
      %132 = sbr.rel (%p130) target = $region16
    $region15: #{tpu_custom_call.1} parent=5 // pred_region
      // Predicated region
      $region17: #{tpu_custom_call.1} parent=15 // pred_check
        %p133 = pneg %p48
      $region18: #{tpu_custom_call.1} parent=15 // pred_check_branch
        %135 = sbr.rel (%p133) target = $region20
      $region19: #{tpu_custom_call.1} parent=15 // pred_region
        %s136 = smul.u32 %s15, 2
        %s137 = sadd.s32 %s136, %s16
        %p138 = scmp.lt.s32.totalorder %s137, 3
        %s139 = scalar_select %p138, %s137, 3
        %s140 = smul.u32 2, %s139
        %s141 = ssub.s32 7, %s140
        %p142 = scmp.lt.s32.totalorder %s141, 2
        %s143 = scalar_select %p142, %s141, 2
        %s144 = smul.u32 128, %s143
        %p145 = scmp.lt.s32.totalorder %s140, 6
        %s146 = scalar_select %p145, %s140, 6
        %s147 = smul.addr %s146, 8
        %s148 = scalar_lea.vmem %s0, %s147
        %s149 = smul.u32 %s15, 2
        %s150 = sadd.s32 %s149, %s16
        %p151 = scmp.lt.s32.totalorder %s150, 3
        %s152 = scalar_select %p151, %s150, 3
        %s153 = smul.u32 2, %s152
        %s154 = ssub.s32 7, %s153
        %p155 = scmp.lt.s32.totalorder %s154, 2
        %s156 = scalar_select %p155, %s154, 2
        %s157 = smul.u32 128, %s156
      $region20: #{tpu_custom_call.1} parent=15 // pred_fallthru
        _
      // Predicated region
      $region21: #{tpu_custom_call.1} parent=15 // pred_check
        %p158 = pneg %p82
      $region22: #{tpu_custom_call.1} parent=15 // pred_check_branch
        %160 = sbr.rel (%p158) target = $region24
      $region23: #{tpu_custom_call.1} parent=15 // pred_region
        %s161 = smul.u32 %s15, 2
        %s162 = sadd.s32 %s161, %s16
        %p163 = scmp.lt.s32.totalorder %s162, 3
        %s164 = scalar_select %p163, %s162, 3
        %s165 = smul.u32 2, %s164
        %s166 = ssub.s32 7, %s165
        %p167 = scmp.lt.s32.totalorder %s166, 2
        %s168 = scalar_select %p167, %s166, 2
        %s169 = smul.u32 128, %s168
        %p170 = scmp.lt.s32.totalorder %s165, 6
        %s171 = scalar_select %p170, %s165, 6
        %s172 = smul.addr %s171, 8
        %s173 = scalar_lea.vmem %s1, %s172
        %s174 = smul.u32 %s15, 2
        %s175 = sadd.s32 %s174, %s16
        %p176 = scmp.lt.s32.totalorder %s175, 3
        %s177 = scalar_select %p176, %s175, 3
        %s178 = smul.u32 2, %s177
        %s179 = ssub.s32 7, %s178
        %p180 = scmp.lt.s32.totalorder %s179, 2
        %s181 = scalar_select %p180, %s179, 2
        %s182 = smul.u32 128, %s181
      $region24: #{tpu_custom_call.1} parent=15 // pred_fallthru
        _
    $region16: #{tpu_custom_call.1} parent=5 // pred_fallthru
      _
    %p183 = scmp.le.s32.totalorder 1, %s8
    %p184 = scmp.lt.s32.totalorder %s8, 5
    %p185 = pnand %p183, %p184
    %p186 = pneg %p185
    // Predicated region
    $region25: #{tpu_custom_call.1} parent=5 // pred_check
      _
    $region26: #{tpu_custom_call.1} parent=5 // pred_check_branch
      %188 = sbr.rel (%p185) target = $region28
    $region27: #{tpu_custom_call.1} parent=5 // pred_region
      %s189 = ssub.s32 %s8, 1
      %s190 = smul.u32 %s17, 2
      %s191 = sadd.s32 %s190, %s18
      %p192 = scmp.lt.s32.totalorder %s191, 3
      %s193 = scalar_select %p192, %s191, 3
      %s194 = smul.u32 2, %s193
      %s195 = ssub.s32 7, %s194
      %p196 = scmp.lt.s32.totalorder %s195, 2
      %s197 = scalar_select %p196, %s195, 2
      %s198 = smul.u32 128, %s197
      %p199 = scmp.lt.s32.totalorder %s194, 6
      %s200 = scalar_select %p199, %s194, 6
      %s201 = smul.addr %s200, 8
      %s202 = scalar_lea.vmem %s0, %s201
      %p203 = pneg %p54
      %p204 = pneg %p51
      %s205 = smul.u32 %s17, 2
      %s206 = sadd.s32 %s205, %s18
      %p207 = scmp.lt.s32.totalorder %s206, 3
      %s208 = scalar_select %p207, %s206, 3
      %s209 = smul.u32 2, %s208
      %s210 = ssub.s32 7, %s209
      %p211 = scmp.lt.s32.totalorder %s210, 2
      %s212 = scalar_select %p211, %s210, 2
      %s213 = smul.u32 128, %s212
      %p214 = scmp.lt.s32.totalorder %s209, 6
      %s215 = scalar_select %p214, %s209, 6
      %s216 = smul.addr %s215, 8
      %s217 = scalar_lea.vmem %s1, %s216
      %p218 = pneg %p88
      %p219 = pneg %p85
      %p220 = pneg %p114
      %p221 = pneg %p111
      %p222 = scmp.lt.s32.totalorder %s17, 1
      %s223 = scalar_select %p222, %s17, 1
      %s224 = scalar_lea.vmem %s2, %s223
      %s225 = smul.u32 %s17, 2
      %s226 = sadd.s32 %s225, %s18
      %p227 = scmp.lt.s32.totalorder %s226, 3
      %s228 = scalar_select %p227, %s226, 3
      %s229 = smul.u32 2, %s228
      %s230 = ssub.s32 7, %s229
      %p231 = scmp.lt.s32.totalorder %s230, 2
      %s232 = scalar_select %p231, %s230, 2
      %s233 = smul.u32 128, %s232
      %p234 = scmp.lt.s32.totalorder %s229, 6
      %s235 = scalar_select %p234, %s229, 6
      %s236 = smul.addr %s235, 8
      %s237 = scalar_lea.vmem %s0, %s236
      %s238 = smul.u32 %s17, 2
      %s239 = sadd.s32 %s238, %s18
      %p240 = scmp.lt.s32.totalorder %s239, 3
      %s241 = scalar_select %p240, %s239, 3
      %s242 = smul.u32 2, %s241
      %s243 = ssub.s32 7, %s242
      %p244 = scmp.lt.s32.totalorder %s243, 2
      %s245 = scalar_select %p244, %s243, 2
      %s246 = smul.u32 128, %s245
      %s247 = smul.u32 %s17, 2
      %s248 = sadd.s32 %s247, %s18
      %p249 = scmp.lt.s32.totalorder %s248, 3
      %s250 = scalar_select %p249, %s248, 3
      %s251 = smul.u32 2, %s250
      %s252 = ssub.s32 7, %s251
      %p253 = scmp.lt.s32.totalorder %s252, 2
      %s254 = scalar_select %p253, %s252, 2
      %s255 = smul.u32 128, %s254
      %p256 = scmp.lt.s32.totalorder %s251, 6
      %s257 = scalar_select %p256, %s251, 6
      %s258 = smul.addr %s257, 8
      %s259 = scalar_lea.vmem %s1, %s258
      %s260 = smul.u32 %s17, 2
      %s261 = sadd.s32 %s260, %s18
      %p262 = scmp.lt.s32.totalorder %s261, 3
      %s263 = scalar_select %p262, %s261, 3
      %s264 = smul.u32 2, %s263
      %s265 = ssub.s32 7, %s264
      %p266 = scmp.lt.s32.totalorder %s265, 2
      %s267 = scalar_select %p266, %s265, 2
      %s268 = smul.u32 128, %s267
      %p269 = scmp.lt.s32.totalorder %s17, 1
      %s270 = scalar_select %p269, %s17, 1
      %s271 = scalar_lea.vmem %s2, %s270
      %s272 = smul.u32 %s17, 2
      %s273 = sadd.s32 %s272, %s18
      %p274 = scmp.eq.s32.totalorder %s18, 0
      // Predicated region
      $region29: #{tpu_custom_call.1} parent=27 // pred_check
        %p275 = pneg %p274
      $region30: #{tpu_custom_call.1} parent=27 // pred_check_branch
        %277 = sbr.rel (%p275) target = $region32
      $region31: #{tpu_custom_call.1} parent=27 // pred_region
        %vm278 = vcmask 0
        %279 = vst.msk [vmem:[%s271] sm:$0x1] %vm278, 0.0
      $region32: #{tpu_custom_call.1} parent=27 // pred_fallthru
        _
      %v280 = vld [vmem:[%s237] sm:$0xff]
      %v281 = vld [vmem:[%s237 + $0x8] sm:$0xff]
      %v282 = vld [vmem:[%s259] sm:$0xff]
      %v283 = vld [vmem:[%s259 + $0x8] sm:$0xff]
      %vm284 = vcmask 261120
      %v285 = vsel %vm284, %v280, -inf
      %286 = vmax.xlane.f32.xlu0 %v285
      %v287 = vpop.xlane.xlu0 %286
      %v288 = vsel %vm284, %v281, -inf
      %289 = vmax.xlane.f32.xlu0 %v288
      %v290 = vpop.xlane.xlu0 %289
      %v291 = vsub.f32 %v280, %v287
      %v292 = vsub.f32 %v281, %v290
      %v293 = vmul.f32 %v291, 1.442695
      %v294 = vpow.pop %v293
      %v295 = vmul.f32 %v292, 1.442695
      %v296 = vpow.pop %v295
      %v297 = vsel %vm284, %v294, 0.0
      %298 = vadd.xlane.f32.xlu0 %v297
      %v299 = vpop.xlane.xlu0 %298
      %v300 = vsel %vm284, %v296, 0.0
      %301 = vadd.xlane.f32.xlu0 %v300
      %v302 = vpop.xlane.xlu0 %301
      %v303 = vlog2.pop %v299
      %v304 = vmul.f32 %v303, 0.6931472
      %v305 = vlog2.pop %v302
      %v306 = vmul.f32 %v305, 0.6931472
      %v307 = vadd.f32 %v287, %v304
      %v308 = vadd.f32 %v290, %v306
      %v309 = vlaneseq
      %v310 = vand.u32 %v309, 127
      %311 = vset.pattern.permute.xlu0 0
      %312 = vperm.xlu0 %311, %v282
      %v313 = vpop.permute.xlu0 %312
      %314 = vset.pattern.permute.xlu0 0
      %315 = vperm.xlu0 %314, %v283
      %v316 = vpop.permute.xlu0 %315
      %vm317 = vcmp.eq.s32.totalorder %v310, %v313
      %vm318 = vcmp.eq.s32.totalorder %v310, %v316
      %v319 = vsel %vm317, %v280, 0.0
      %v320 = vsel %vm318, %v281, 0.0
      %v321 = vsel %vm284, %v319, 0.0
      %322 = vadd.xlane.f32.xlu0 %v321
      %v323 = vpop.xlane.xlu0 %322
      %v324 = vsel %vm284, %v320, 0.0
      %325 = vadd.xlane.f32.xlu0 %v324
      %v326 = vpop.xlane.xlu0 %325
      %v327 = vsub.f32 %v307, %v323
      %v328 = vsub.f32 %v308, %v326
      %s329 = smul.u32 %s273, 16
      %s330 = ssub.s32 50, %s329
      %v331 = vlaneseq
      %v332 = vshrl.u32 %v331, 7
      %v333 = vadd.s32 %v332, 8
      %v334 = vstv %s330
      %vm335 = vcmp.lt.s32.totalorder %v332, %v334
      %vm336 = vcmp.lt.s32.totalorder %v333, %v334
      %v337 = vsel %vm335, %v327, 0.0
      %v338 = vsel %vm336, %v328, 0.0
      %v339 = vld [vmem:[%s271] sm:$0x1]
      %vm340 = vcmask 7168
      %v341 = vsel %vm340, %v337, 0.0
      %v342 = vsel %vm340, %v338, 0.0
      %v343 = vadd.f32 %v341, %v342
      %344 = vadd.xlane.f32.xlu0 %v343
      %v345 = vpop.xlane.xlu0 %344
      %v346 = vrot.slane %v345, 4
      %v347 = vadd.f32 %v345, %v346
      %v348 = vrot.slane %v347, 2
      %v349 = vadd.f32 %v347, %v348
      %v350 = vrot.slane %v349, 1
      %v351 = vadd.f32 %v349, %v350
      %s352 = vtos %v351
      %v353 = vstv %s352
      %v354 = vadd.f32 %v339, %v353
      %vm355 = vcmask 0
      %356 = vst.msk [vmem:[%s271] sm:$0x1] %vm355, %v354
      %p357 = scmp.lt.s32.totalorder %s17, 1
      %s358 = scalar_select %p357, %s17, 1
      %s359 = scalar_lea.vmem %s2, %s358
      // Predicated region
      $region33: #{tpu_custom_call.1} parent=27 // pred_check
        %p360 = pneg %p111
      $region34: #{tpu_custom_call.1} parent=27 // pred_check_branch
        %362 = sbr.rel (%p360) target = $region36
      $region35: #{tpu_custom_call.1} parent=27 // pred_region
        _
      $region36: #{tpu_custom_call.1} parent=27 // pred_fallthru
        _
    $region28: #{tpu_custom_call.1} parent=5 // pred_fallthru
      _
    %p363 = scmp.le.s32.totalorder 2, %s8
    // Predicated region
    $region37: #{tpu_custom_call.1} parent=5 // pred_check
      %p364 = pneg %p363
    $region38: #{tpu_custom_call.1} parent=5 // pred_check_branch
      %366 = sbr.rel (%p364) target = $region40
    $region39: #{tpu_custom_call.1} parent=5 // pred_region
      %s367 = ssub.s32 %s8, 2
      // Predicated region
      $region41: #{tpu_custom_call.1} parent=39 // pred_check
        %p368 = pneg %p117
      $region42: #{tpu_custom_call.1} parent=39 // pred_check_branch
        %370 = sbr.rel (%p368) target = $region44
      $region43: #{tpu_custom_call.1} parent=39 // pred_region
        %p371 = scmp.lt.s32.totalorder %s19, 1
        %s372 = scalar_select %p371, %s19, 1
        %s373 = scalar_lea.vmem %s2, %s372
      $region44: #{tpu_custom_call.1} parent=39 // pred_fallthru
        _
    $region40: #{tpu_custom_call.1} parent=5 // pred_fallthru
      _
  $region6: #{tpu_custom_call.1} parent=0 // loop_footer
    %s12 = sadd.s32 1, %s8
  $region7: #{tpu_custom_call.1} parent=0 // loop_footer_branch
    %7 = sbr.rel target = $region3
  $region8: #{tpu_custom_call.1} parent=0 // loop_exit
    _

</llo_original>
